<compile_context>
chip_gen: v7x
topology: tpu7x:2x2x1
jax: 0.10.0
libtpu: 0.0.40
codegen_flags: <defaults>
</compile_context>

<pallas_src>
import functools
import math

import jax
import jax.numpy as jnp
from jax import lax
from jax.experimental import pallas as pl
from jax.experimental.pallas import tpu as pltpu

_EPS = 0.0001
_LOG_2PI = math.log(2.0 * 3.141592)  # matches torch.log(... + 2 * 3.141592)


def _aleatoric_sum_kernel(x_ref, y_ref, out_ref, *, d, tm, valid_rows, need_mask):
    """Accumulate sum((mu - y)^2 / sigma + log(sigma + eps)) over row tiles.

    x_ref: (TM, 2*D) = [mu | sigma]   y_ref: (TM, D)   out_ref: (1, 1) in SMEM.
    """
    @pl.when(pl.program_id(0) == 0)
    def _init():
        out_ref[0, 0] = jnp.float32(0.0)

    mu = x_ref[:, :d]
    sigma = x_ref[:, d:]
    y = y_ref[...]

    if need_mask:
        row = lax.broadcasted_iota(jnp.int32, (tm, 1), 0) + pl.program_id(0) * tm
        mask = row < valid_rows                      # (TM, 1), broadcasts over lanes
        sigma = jnp.where(mask, sigma, 1.0)          # keep padded rows finite

    diff = mu - y
    term = diff * diff / sigma + jnp.log(sigma + _EPS)   # 0.5 & log(2*pi) folded later

    if need_mask:
        term = jnp.where(mask, term, 0.0)

    out_ref[0, 0] += jnp.sum(term)


def aleatoric_loss(my_outputs, my_labels, *, tm=None):
    """my_outputs: (B, 2, D) float32, my_labels: (B, D) float32 -> scalar float32."""
    B, two, D = my_outputs.shape
    assert two == 2, "expected (B, 2, D) outputs"

    # Free reshape of the contiguous (B, 2, D) tensor -> single (B, 2*D) input.
    x = my_outputs.reshape(B, 2 * D)
    y = my_labels

    if tm is None:
        # <= ~2 MiB per outputs tile (f32), safe with double buffering on all gens.
        cap = max(8, min(512, (2 * 1024 * 1024) // (2 * D * 4)))
        tm = B if B <= cap else (cap // 8) * 8
    tm = int(min(tm, B))
    if tm != B and tm % 8 != 0:
        raise ValueError("tm must equal B or be a multiple of 8")

    num_tiles = pl.cdiv(B, tm)
    need_mask = (num_tiles * tm) != B

    kernel = functools.partial(
        _aleatoric_sum_kernel, d=D, tm=tm, valid_rows=B, need_mask=need_mask
    )

    total = pl.pallas_call(
        kernel,
        out_shape=jax.ShapeDtypeStruct((1, 1), jnp.float32),
        grid=(num_tiles,),
        in_specs=[
            pl.BlockSpec((tm, 2 * D), lambda i: (i, 0)),
            pl.BlockSpec((tm, D), lambda i: (i, 0)),
        ],
        out_specs=pl.BlockSpec(
            (1, 1), lambda i: (0, 0), memory_space=pltpu.MemorySpace.SMEM
        ),
        compiler_params=pltpu.CompilerParams(
            dimension_semantics=("arbitrary",),      # scalar accumulator carried across tiles
            vmem_limit_bytes=32 * 1024 * 1024,
        ),
    )(x, y)[0, 0]

    n = B * D
    return 0.5 * (total / n + _LOG_2PI)


def _reference(my_outputs, my_labels):
    eps = 0.0001
    mu = my_outputs[:, 0, :]
    sigma = my_outputs[:, 1, :]
    se = (mu - my_labels) ** 2
    mse = se / sigma
    reg = jnp.log(sigma + eps)
    cons = jnp.log(jnp.zeros_like(my_labels) + 2.0 * 3.141592)
    return jnp.mean((mse + reg + cons) * 0.5)


if __name__ == "__main__":
    B, D = 20, 128
    key = jax.random.PRNGKey(0)
    k_mu, k_sigma, k_y = jax.random.split(key, 3)

    mu = jax.random.normal(k_mu, (B, D), dtype=jnp.float32)
    # keep sigma positive so log / reciprocal are well defined (as the loss assumes)
    sigma = jax.random.uniform(k_sigma, (B, D), dtype=jnp.float32,
                               minval=0.5, maxval=1.5)
    my_outputs = jnp.stack([mu, sigma], axis=1)          # (B, 2, D)
    my_labels = jax.random.normal(k_y, (B, D), dtype=jnp.float32)

    ref = _reference(my_outputs, my_labels)

    # Auto tile size (single full-row tile at this small B).
    loss = aleatoric_loss(my_outputs, my_labels)
    jax.block_until_ready(loss)
    assert jnp.allclose(loss, ref, rtol=1e-5, atol=1e-5), (loss, ref)

    # Forced small tile: multi-step grid with a partially-masked final tile.
    loss_tiled = aleatoric_loss(my_outputs, my_labels, tm=8)
    jax.block_until_ready(loss_tiled)
    assert jnp.allclose(loss_tiled, ref, rtol=1e-5, atol=1e-5), (loss_tiled, ref)

    print("KERNEL_OK")
</pallas_src>

<mosaic_0001>
module attributes {stable_mosaic.version = 11 : i64} {
  func.func @_aleatoric_sum_kernel(%arg0: i32, %arg1: memref<20x256xf32, #tpu.memory_space<vmem>>, %arg2: memref<20x128xf32, #tpu.memory_space<vmem>>, %arg3: memref<1x1xf32, #tpu.memory_space<smem>>) attributes {dimension_semantics = [#tpu.dimension_semantics<arbitrary>], iteration_bounds = array<i64: 1>, scalar_prefetch = 0 : i64, scratch_operands = 0 : i64, tpu.core_type = #tpu.core_type<tc>, window_params = [{transform_indices = @transform_0, window_bounds = array<i64: 20, 256>}, {transform_indices = @transform_1, window_bounds = array<i64: 20, 128>}, {transform_indices = @transform_2, window_bounds = array<i64: 1, 1>}]} {
    %c0_i32 = arith.constant 0 : i32
    %0 = arith.cmpi eq, %arg0, %c0_i32 : i32
    %1 = arith.extui %0 : i1 to i32
    %c0_i32_0 = arith.constant 0 : i32
    %2 = arith.cmpi ne, %1, %c0_i32_0 : i32
    scf.if %2 {
      %cst_10 = arith.constant 0.000000e+00 : f32
      %c0_11 = arith.constant 0 : index
      %c0_12 = arith.constant 0 : index
      %20 = memref.load %arg3[%c0_11, %c0_12] : memref<1x1xf32, #tpu.memory_space<smem>>
      memref.store %cst_10, %arg3[%c0_11, %c0_12] : memref<1x1xf32, #tpu.memory_space<smem>>
    } else {
    }
    %c0 = arith.constant 0 : index
    %c0_1 = arith.constant 0 : index
    %3 = vector.load %arg1[%c0, %c0_1] : memref<20x256xf32, #tpu.memory_space<vmem>>, vector<20x128xf32>
    %c0_2 = arith.constant 0 : index
    %c128 = arith.constant 128 : index
    %4 = vector.load %arg1[%c0_2, %c128] : memref<20x256xf32, #tpu.memory_space<vmem>>, vector<20x128xf32>
    %c0_3 = arith.constant 0 : index
    %c0_4 = arith.constant 0 : index
    %5 = vector.load %arg2[%c0_3, %c0_4] : memref<20x128xf32, #tpu.memory_space<vmem>>, vector<20x128xf32>
    %6 = arith.subf %3, %5 : vector<20x128xf32>
    %7 = arith.mulf %6, %6 : vector<20x128xf32>
    %8 = arith.divf %7, %4 : vector<20x128xf32>
    %cst = arith.constant 9.99999974E-5 : f32
    %9 = vector.broadcast %cst : f32 to vector<20x128xf32>
    %10 = arith.addf %4, %9 : vector<20x128xf32>
    %11 = math.log %10 : vector<20x128xf32>
    %12 = arith.addf %8, %11 : vector<20x128xf32>
    %c0_5 = arith.constant 0 : index
    %c0_6 = arith.constant 0 : index
    %13 = memref.load %arg3[%c0_5, %c0_6] : memref<1x1xf32, #tpu.memory_space<smem>>
    %14 = vector.shape_cast %12 : vector<20x128xf32> to vector<1x20x128xf32>
    %cst_7 = arith.constant dense<0.000000e+00> : vector<1xf32>
    %15 = vector.multi_reduction <add>, %14, %cst_7 [1, 2] : vector<1x20x128xf32> to vector<1xf32>
    %16 = vector.shape_cast %15 : vector<1xf32> to vector<1x1x1xf32>
    %17 = vector.extract %16[0, 0, 0] : f32 from vector<1x1x1xf32>
    %18 = arith.addf %13, %17 : f32
    %c0_8 = arith.constant 0 : index
    %c0_9 = arith.constant 0 : index
    %19 = memref.load %arg3[%c0_8, %c0_9] : memref<1x1xf32, #tpu.memory_space<smem>>
    memref.store %18, %arg3[%c0_8, %c0_9] : memref<1x1xf32, #tpu.memory_space<smem>>
    return
  }
  func.func @transform_0(%arg0: i32) -> (i32, i32) {
    %c0_i32 = arith.constant 0 : i32
    %c0_i32_0 = arith.constant 0 : i32
    return %arg0, %c0_i32 : i32, i32
  }
  func.func @transform_1(%arg0: i32) -> (i32, i32) {
    %c0_i32 = arith.constant 0 : i32
    %c0_i32_0 = arith.constant 0 : i32
    return %arg0, %c0_i32 : i32, i32
  }
  func.func @transform_2(%arg0: i32) -> (i32, i32) {
    %c0_i32 = arith.constant 0 : i32
    %c0_i32_0 = arith.constant 0 : i32
    %c0_i32_1 = arith.constant 0 : i32
    return %c0_i32, %c0_i32_0 : i32, i32
  }
}

</mosaic_0001>

<llo_original>
// kernel: tpu_custom_call.1
$region0: #{tpu_custom_call.1}
  #allocation0 [shape = 'u32[]', space=smem, size = 0x4, offset = 0x4, fixed_abs, tag = 'smem constant byte address 0x4 - core index']
  #allocation1 [shape = 'u32[144,128]{1,0:T(1,128)}', space=vmem, size = 0x12000, scoped, tag = 'internal scratch']
  %s0 = inlined_call_operand.hbm [shape: f32[20,256], index: 0, kind: input, shape index: {}]
  %s1 = inlined_call_operand.hbm [shape: f32[20,128], index: 1, kind: input, shape index: {}]
  %s2 = inlined_call_operand.hbm [shape: f32[1,1], index: 2, kind: output, shape index: {}]
  %s3 = sld [smem:[#allocation0]]
  $region30: #{tpu_custom_call.1} parent=0
    _
  %s5 = ssub.s32 1, %s3
  %s6 = scalar_select 0, %s5, %s3
  $region1: #{tpu_custom_call.1} parent=0
    #allocation2 [shape = 'u8[24576]{0}', space=vmem, size = 0x6000, scoped, tag = 'input window, operand 0, single buffered']
    #allocation3 [shape = 's32[1]{0}', space=sflag, size = 0x4, scoped, tag = 'scoped memory for tpu_custom_call.1']
    #allocation4 [shape = 's32[1]{0}', space=sflag, size = 0x4, scoped, tag = 'scoped memory for tpu_custom_call.1']
    #allocation5 [shape = 'u8[12288]{0}', space=vmem, size = 0x3000, scoped, tag = 'input window, operand 1, single buffered']
    #allocation6 [shape = 's32[1]{0}', space=sflag, size = 0x4, scoped, tag = 'scoped memory for tpu_custom_call.1']
    #allocation7 [shape = 'u8[512]{0}', space=smem, size = 0x200, scoped, tag = 'output window, operand 0, single buffered']
    %7 = vsyncpa [#allocation3], 0
    %8 = vsyncpa [#allocation6], 0
    %9 = vsyncpa [#allocation4], 0
    // Predicated region
    $region2: #{tpu_custom_call.1} parent=1 // pred_check
      _
    $region3: #{tpu_custom_call.1} parent=1 // pred_check_branch
      %11 = sbr.rel (0) target = $region5
    $region4: #{tpu_custom_call.1} parent=1 // pred_region
      %s13 = ssub.s32 768, 768
      %14 = vsyncadd [#allocation3], %s13
      %s15 = sshll.u32 [#allocation2], 4
      %s16 = int_to_ptr.vmem [resolvable:$true] %s15
      %21 = dma.hbm_to_vmem [thread:$0]  %s0, 768, %s16, [#allocation3], 256, 256, 16
    $region5: #{tpu_custom_call.1} parent=1 // pred_fallthru
      _
    // Predicated region
    $region6: #{tpu_custom_call.1} parent=1 // pred_check
      _
    $region7: #{tpu_custom_call.1} parent=1 // pred_check_branch
      %23 = sbr.rel (0) target = $region9
    $region8: #{tpu_custom_call.1} parent=1 // pred_region
      %s25 = ssub.s32 384, 384
      %26 = vsyncadd [#allocation6], %s25
      %s27 = sshll.u32 [#allocation5], 4
      %s28 = int_to_ptr.vmem [resolvable:$true] %s27
      %33 = dma.hbm_to_vmem [thread:$0]  %s1, 384, %s28, [#allocation6], 128, 128, 8
    $region9: #{tpu_custom_call.1} parent=1 // pred_fallthru
      _
    // Predicated region
    $region10: #{tpu_custom_call.1} parent=1 // pred_check
      _
    $region11: #{tpu_custom_call.1} parent=1 // pred_check_branch
      %35 = sbr.rel (0) target = $region13
    $region12: #{tpu_custom_call.1} parent=1 // pred_region
      %36 = dma.done [#allocation3], 768
    $region13: #{tpu_custom_call.1} parent=1 // pred_fallthru
      _
    // Predicated region
    $region14: #{tpu_custom_call.1} parent=1 // pred_check
      _
    $region15: #{tpu_custom_call.1} parent=1 // pred_check_branch
      %38 = sbr.rel (0) target = $region17
    $region16: #{tpu_custom_call.1} parent=1 // pred_region
      %39 = dma.done [#allocation6], 384
    $region17: #{tpu_custom_call.1} parent=1 // pred_fallthru
      _
    %p40 = scmp.eq.s32.totalorder 0, 0
    // Predicated region
    $region18: #{tpu_custom_call.1} parent=1 // pred_check
      %p41 = pneg %p40
    $region19: #{tpu_custom_call.1} parent=1 // pred_check_branch
      %43 = sbr.rel (%p41) target = $region21
    $region20: #{tpu_custom_call.1} parent=1 // pred_region
      %s44 = scalar_lea.smem [#allocation7], 0
      %45 = sst [smem:[%s44]] 0.0
    $region21: #{tpu_custom_call.1} parent=1 // pred_fallthru
      _
    %v46 = vld [vmem:[#allocation2] sm:$0xff]
    %v47 = vld [vmem:[#allocation2 + $0x10] sm:$0xff]
    %v48 = vld [vmem:[#allocation2 + $0x20] sm:$0xf]
    %v49 = vld [vmem:[#allocation2 + $0x8] sm:$0xff]
    %v50 = vld [vmem:[#allocation2 + $0x18] sm:$0xff]
    %v51 = vld [vmem:[#allocation2 + $0x28] sm:$0xf]
    %v52 = vld [vmem:[#allocation5] sm:$0xff]
    %v53 = vld [vmem:[#allocation5 + $0x8] sm:$0xff]
    %v54 = vld [vmem:[#allocation5 + $0x10] sm:$0xf]
    %v55 = vsub.f32 %v46, %v52
    %v56 = vsub.f32 %v47, %v53
    %v57 = vsub.f32 %v48, %v54
    %v58 = vmul.f32 %v55, %v55
    %v59 = vmul.f32 %v56, %v56
    %v60 = vmul.f32 %v57, %v57
    %v61 = vrcp.pop %v49
    %v62 = vmul.f32 %v58, %v61
    %v63 = vrcp.pop %v50
    %v64 = vmul.f32 %v59, %v63
    %v65 = vrcp.pop %v51
    %v66 = vmul.f32 %v60, %v65
    %v67 = vadd.f32 %v49, 0.0001
    %v68 = vadd.f32 %v50, 0.0001
    %v69 = vadd.f32 %v51, 0.0001
    %v70 = vlog2.pop %v67
    %v71 = vmul.f32 %v70, 0.6931472
    %v72 = vlog2.pop %v68
    %v73 = vmul.f32 %v72, 0.6931472
    %v74 = vlog2.pop %v69
    %v75 = vmul.f32 %v74, 0.6931472
    %v76 = vadd.f32 %v62, %v71
    %v77 = vadd.f32 %v64, %v73
    %v78 = vadd.f32 %v66, %v75
    %s79 = sld [smem:[#allocation7]]
    %v80 = vadd.f32 %v76, %v77
    %vm81 = vcmask 1043456
    %v82 = vsel %vm81, %v78, 0.0
    %v83 = vadd.f32 %v80, %v82
    %84 = vadd.xlane.f32.xlu0 %v83
    %v85 = vpop.xlane.xlu0 %84
    %v86 = vrot.slane %v85, 4
    %v87 = vadd.f32 %v85, %v86
    %v88 = vrot.slane %v87, 2
    %v89 = vadd.f32 %v87, %v88
    %v90 = vrot.slane %v89, 1
    %v91 = vadd.f32 %v89, %v90
    %s92 = vtos %v91
    %s93 = sadd.f32 %s79, %s92
    %s94 = scalar_lea.smem [#allocation7], 0
    %95 = sst [smem:[%s94]] %s93
    // Predicated region
    $region22: #{tpu_custom_call.1} parent=1 // pred_check
      _
    $region23: #{tpu_custom_call.1} parent=1 // pred_check_branch
      %97 = sbr.rel (0) target = $region25
    $region24: #{tpu_custom_call.1} parent=1 // pred_region
      %s99 = ssub.s32 16, 16
      %100 = vsyncadd [#allocation4], %s99
      %103 = dma.smem_to_hbm [#allocation7], 16, %s2, [#allocation4]
    $region25: #{tpu_custom_call.1} parent=1 // pred_fallthru
      _
    // Predicated region
    $region26: #{tpu_custom_call.1} parent=1 // pred_check
      _
    $region27: #{tpu_custom_call.1} parent=1 // pred_check_branch
      %105 = sbr.rel (0) target = $region29
    $region28: #{tpu_custom_call.1} parent=1 // pred_region
      %106 = dma.done [#allocation4], 16
    $region29: #{tpu_custom_call.1} parent=1 // pred_fallthru
      _
    %107 = sfence
    %108 = vsyncpa [#allocation3], 1
    %109 = vsyncpa [#allocation6], 1
    %110 = vsyncpa [#allocation4], 1

</llo_original>
